<compile_context>
chip_gen: v5e
topology: v5e:2x2
jax: 0.10.0
libtpu: 0.0.40
codegen_flags: <defaults>
</compile_context>

<pallas_src>
import functools

import jax
import jax.numpy as jnp
from jax.experimental import pallas as pl
from jax.experimental.pallas import tpu as pltpu

BN_EPS = 1e-5


# ---------------------------------------------------------------------------
# Pallas kernel: one grid step = Nb batch elements, layout (C, H*W).
# ---------------------------------------------------------------------------
def shuffle_unit_kernel(x_ref, w1_ref, b1_ref, wd_ref, bd_ref, w3_ref, b3_ref,
                        mask_ref, o_ref, *, H, W, Nb):
    """
    x_ref   : (Nb, Cin, HW)   input, spatial on lanes
    w1_ref  : (Cb, Cin)       compress weight (block-diag, BN1 + shuffle folded)
    b1_ref  : (Cb, 1)         compress bias (BN1 folded, shuffled)
    wd_ref  : (9, Cb, 1)      depthwise 3x3 taps, tap-major, BN2-scaled
    bd_ref  : (Cb, 1)         depthwise bias (BN2 folded)
    w3_ref  : (Cout, Cb)      expand weight (block-diag, BN3 folded)
    b3_ref  : (Cout, 1)       expand bias (BN3 folded)
    mask_ref: (9, 1, HW)      0/1 halo masks for the 9 taps (pad=1 boundary)
    o_ref   : (Nb, Cout, HW)  output
    """
    HW = H * W

    for b in range(Nb):                                        # static unroll
        x = x_ref[b]                                           # (Cin, HW) f32

        # --- grouped 1x1 compress + BN1 + ReLU (shuffle folded in w1/b1) ----
        a = jnp.maximum(
            jnp.dot(w1_ref[...], x.astype(w1_ref.dtype),
                    preferred_element_type=jnp.float32) + b1_ref[...],
            0.0)                                               # (Cb, HW)

        # --- depthwise 3x3 (padding=1) + BN2 ---------------------------------
        # Centre tap initialises the accumulator (+ folded bias); the 8 other
        # taps are lane-rolls of `a` (shifted[p] = a[p + dy*W + dx]) with the
        # out-of-image positions zeroed by the precomputed masks.
        acc = a * wd_ref[4] + bd_ref[...]                      # (Cb, HW)
        for k in (0, 1, 2, 3, 5, 6, 7, 8):                     # static unroll
            dy, dx = k // 3 - 1, k % 3 - 1
            off = dy * W + dx
            shifted = pltpu.roll(a, (-off) % HW, axis=1)       # XLU lane rotate
            acc = acc + shifted * wd_ref[k] * mask_ref[k]

        # --- grouped 1x1 expand + BN3 (no ReLU) -----------------------------
        e = (jnp.dot(w3_ref[...], acc.astype(w3_ref.dtype),
                     preferred_element_type=jnp.float32) + b3_ref[...])

        # --- combine='add' residual + final ReLU ----------------------------
        o_ref[b] = jnp.maximum(x + e, 0.0)


# ---------------------------------------------------------------------------
# Wrapper-side parameter folding (BN, conv bias, channel shuffle, grouping).
# ---------------------------------------------------------------------------
def fold_params(p, groups):
    Cb = p['w_c'].shape[0]
    Cout = p['w_e'].shape[0]
    cb_pg = Cb // groups
    cout_pg = Cout // groups

    s1 = p['bn1_g'] / jnp.sqrt(p['bn1_v'] + BN_EPS)
    s2 = p['bn2_g'] / jnp.sqrt(p['bn2_v'] + BN_EPS)
    s3 = p['bn3_g'] / jnp.sqrt(p['bn3_v'] + BN_EPS)

    # Grouped compress 1x1 -> block-diagonal (Cb, Cin), out-channels on rows.
    wc = p['w_c'][:, :, 0, 0]                                  # (Cb, Cin//g)
    w1 = jax.scipy.linalg.block_diag(
        *[wc[g * cb_pg:(g + 1) * cb_pg, :] for g in range(groups)])
    w1 = w1 * s1[:, None]
    b1 = (p['b_c'] - p['bn1_m']) * s1 + p['bn1_b']

    # Fold channel_shuffle: shuffled channel j = pre-shuffle channel src[j].
    src = jnp.arange(Cb).reshape(groups, cb_pg).T.reshape(-1)
    w1 = w1[src, :]
    b1 = b1[src]

    # Depthwise 3x3 -> tap-major per-channel scales (9, Cb, 1), BN2 folded.
    wd = jnp.transpose(p['w_d'][:, 0, :, :].reshape(Cb, 9), (1, 0))  # (9, Cb)
    wd = (wd * s2[None, :]).reshape(9, Cb, 1)
    bd = ((p['b_d'] - p['bn2_m']) * s2 + p['bn2_b']).reshape(Cb, 1)

    # Grouped expand 1x1 -> block-diagonal (Cout, Cb).
    # NOTE: for large ShuffleNet stages (Cb/Cout in the hundreds) three
    # per-group matmuls beat the block-diag single matmul; block-diag is the
    # right call at this small test size (review item kept as-is).
    we = p['w_e'][:, :, 0, 0]                                  # (Cout, Cb//g)
    w3 = jax.scipy.linalg.block_diag(
        *[we[g * cout_pg:(g + 1) * cout_pg, :] for g in range(groups)])
    w3 = w3 * s3[:, None]
    b3 = ((p['b_e'] - p['bn3_m']) * s3 + p['bn3_b']).reshape(Cout, 1)

    f32 = jnp.float32
    return (w1.astype(f32), b1.reshape(Cb, 1).astype(f32),
            wd.astype(f32), bd.astype(f32),
            w3.astype(f32), b3.astype(f32))


def build_tap_masks(H, W):
    """(9, 1, H*W) f32 0/1 masks: tap k is valid at position (i, j) iff the
    3x3 neighbour (i + dy_k, j + dx_k) lies inside the image (zero padding)."""
    r = jnp.arange(H)[:, None]
    c = jnp.arange(W)[None, :]
    masks = []
    for k in range(9):
        dy, dx = k // 3 - 1, k % 3 - 1
        m = ((r + dy >= 0) & (r + dy < H) & (c + dx >= 0) & (c + dx < W))
        masks.append(m.reshape(1, H * W))
    return jnp.stack(masks, 0).astype(jnp.float32)


def _pick_batch_block(N, per_elem_bytes, target_bytes=2 << 20):
    """Batch elements per grid step: large enough to amortize per-step
    overhead, but keep >= 2 grid steps (v7x has two TensorCores) and divide N."""
    nb = int(max(1, min(N, target_bytes // max(per_elem_bytes, 1))))
    while nb > 1 and N // nb < 2:
        nb -= 1
    while N % nb:
        nb -= 1
    return nb


# ---------------------------------------------------------------------------
# Public forward: NCHW in, NCHW out (no transposes -- only free reshapes).
# ---------------------------------------------------------------------------
def shuffle_unit_forward(x_nchw, params, groups, use_bf16_matmul=False):
    N, Cin, H, W = x_nchw.shape
    Cb = params['w_c'].shape[0]
    Cout = params['w_e'].shape[0]
    assert Cin == Cout, "combine='add' requires in_channels == out_channels"
    HW = H * W

    w1, b1, wd, bd, w3, b3 = fold_params(params, groups)
    if use_bf16_matmul:
        # v6e/v7x fast path: bf16 MXU operands, f32 accumulation; depthwise and
        # residual math remain f32 on the VPU (v5e has no bf16 VPU).
        w1 = w1.astype(jnp.bfloat16)
        w3 = w3.astype(jnp.bfloat16)
    masks = build_tap_masks(H, W)                              # (9, 1, HW)

    # NCHW -> (N, C, H*W): contiguous reshape, zero data movement.
    x = x_nchw.reshape(N, Cin, HW)

    per_elem_bytes = (Cin + Cout) * HW * 4
    Nb = _pick_batch_block(N, per_elem_bytes)
    grid = (N // Nb,)

    weight_bytes = sum(int(a.size) * a.dtype.itemsize
                       for a in (w1, b1, wd, bd, w3, b3, masks))
    need = 2 * Nb * per_elem_bytes + weight_bytes + (4 << 20)  # dbl-buffered + slack
    vmem_limit = int(min(64 << 20, max(16 << 20, need)))       # v7x-safe cap

    kernel = functools.partial(shuffle_unit_kernel, H=H, W=W, Nb=Nb)

    out = pl.pallas_call(
        kernel,
        out_shape=jax.ShapeDtypeStruct((N, Cout, HW), jnp.float32),
        grid_spec=pltpu.PrefetchScalarGridSpec(
            num_scalar_prefetch=0,
            grid=grid,
            in_specs=[
                pl.BlockSpec((Nb, Cin, HW), lambda n: (n, 0, 0)),
                pl.BlockSpec(w1.shape, lambda n: (0, 0)),
                pl.BlockSpec(b1.shape, lambda n: (0, 0)),
                pl.BlockSpec(wd.shape, lambda n: (0, 0, 0)),
                pl.BlockSpec(bd.shape, lambda n: (0, 0)),
                pl.BlockSpec(w3.shape, lambda n: (0, 0)),
                pl.BlockSpec(b3.shape, lambda n: (0, 0)),
                pl.BlockSpec(masks.shape, lambda n: (0, 0, 0)),
            ],
            out_specs=pl.BlockSpec((Nb, Cout, HW), lambda n: (n, 0, 0)),
        ),
        compiler_params=pltpu.CompilerParams(
            dimension_semantics=("parallel",),      # v7x: shard batch over 2 TCs
            vmem_limit_bytes=vmem_limit),
    )(x, w1, b1, wd, bd, w3, b3, masks)

    # (N, Cout, H*W) -> NCHW: contiguous reshape, zero data movement.
    return out.reshape(N, Cout, H, W)


# ---------------------------------------------------------------------------
# Pure-JAX reference reproducing the PyTorch forward (eval-mode BatchNorm).
# ---------------------------------------------------------------------------
def shuffle_unit_reference(x, p, groups):
    dn = ('NCHW', 'OIHW', 'NCHW')

    def conv(inp, w, b, g, pad):
        y = jax.lax.conv_general_dilated(
            inp, w, window_strides=(1, 1), padding=pad,
            dimension_numbers=dn, feature_group_count=g)
        return y + b[None, :, None, None]

    def bn(y, g_, b_, m_, v_):
        s = g_ / jnp.sqrt(v_ + BN_EPS)
        return ((y - m_[None, :, None, None]) * s[None, :, None, None]
                + b_[None, :, None, None])

    residual = x
    out = conv(x, p['w_c'], p['b_c'], groups, 'VALID')
    out = jax.nn.relu(bn(out, p['bn1_g'], p['bn1_b'], p['bn1_m'], p['bn1_v']))
    # channel_shuffle
    N, C, H, W = out.shape
    out = out.reshape(N, groups, C // groups, H, W)
    out = jnp.transpose(out, (0, 2, 1, 3, 4)).reshape(N, C, H, W)
    # depthwise 3x3, padding=1
    out = conv(out, p['w_d'], p['b_d'], C, ((1, 1), (1, 1)))
    out = bn(out, p['bn2_g'], p['bn2_b'], p['bn2_m'], p['bn2_v'])
    # grouped expand 1x1
    out = conv(out, p['w_e'], p['b_e'], groups, 'VALID')
    out = bn(out, p['bn3_g'], p['bn3_b'], p['bn3_m'], p['bn3_v'])
    return jax.nn.relu(residual + out)


if __name__ == "__main__":
    # Smallest-ish valid ShuffleUnit config for combine='add', groups=3:
    # in_channels == out_channels, out_channels % 4 == 0, bottleneck % 3 == 0.
    N, Cin, H, W = 2, 48, 16, 16
    groups = 3
    Cout = Cin
    Cb = Cout // 4                     # bottleneck_channels = 12

    key = jax.random.PRNGKey(0)
    ks = jax.random.split(key, 19)
    f32 = jnp.float32

    x = jax.random.normal(ks[0], (N, Cin, H, W), dtype=f32)

    params = {
        # compress grouped 1x1 (PyTorch layout: (out, in/groups, 1, 1)) + BN1
        'w_c':   0.1 * jax.random.normal(ks[1], (Cb, Cin // groups, 1, 1), f32),
        'b_c':   0.1 * jax.random.normal(ks[2], (Cb,), f32),
        'bn1_g': 1.0 + 0.1 * jax.random.normal(ks[3], (Cb,), f32),
        'bn1_b': 0.1 * jax.random.normal(ks[4], (Cb,), f32),
        'bn1_m': 0.1 * jax.random.normal(ks[5], (Cb,), f32),
        'bn1_v': 1.0 + 0.1 * jax.random.uniform(ks[6], (Cb,), f32),
        # depthwise 3x3 (groups = Cb) + BN2
        'w_d':   0.1 * jax.random.normal(ks[7], (Cb, 1, 3, 3), f32),
        'b_d':   0.1 * jax.random.normal(ks[8], (Cb,), f32),
        'bn2_g': 1.0 + 0.1 * jax.random.normal(ks[9], (Cb,), f32),
        'bn2_b': 0.1 * jax.random.normal(ks[10], (Cb,), f32),
        'bn2_m': 0.1 * jax.random.normal(ks[11], (Cb,), f32),
        'bn2_v': 1.0 + 0.1 * jax.random.uniform(ks[12], (Cb,), f32),
        # expand grouped 1x1 + BN3
        'w_e':   0.1 * jax.random.normal(ks[13], (Cout, Cb // groups, 1, 1), f32),
        'b_e':   0.1 * jax.random.normal(ks[14], (Cout,), f32),
        'bn3_g': 1.0 + 0.1 * jax.random.normal(ks[15], (Cout,), f32),
        'bn3_b': 0.1 * jax.random.normal(ks[16], (Cout,), f32),
        'bn3_m': 0.1 * jax.random.normal(ks[17], (Cout,), f32),
        'bn3_v': 1.0 + 0.1 * jax.random.uniform(ks[18], (Cout,), f32),
    }

    out = shuffle_unit_forward(x, params, groups)
    out = jax.block_until_ready(out)

    ref = shuffle_unit_reference(x, params, groups)
    ref = jax.block_until_ready(ref)

    assert out.shape == (N, Cout, H, W), out.shape
    assert jnp.allclose(out, ref, atol=5e-4, rtol=2e-3), \
        float(jnp.max(jnp.abs(out - ref)))

    print("KERNEL_OK")
</pallas_src>

<mosaic_0001>
module attributes {stable_mosaic.version = 11 : i64} {
  func.func @shuffle_unit_kernel(%arg0: i32, %arg1: memref<1x48x256xf32, #tpu.memory_space<vmem>>, %arg2: memref<12x48xf32, #tpu.memory_space<vmem>>, %arg3: memref<12x1xf32, #tpu.memory_space<vmem>>, %arg4: memref<9x12x1xf32, #tpu.memory_space<vmem>>, %arg5: memref<12x1xf32, #tpu.memory_space<vmem>>, %arg6: memref<48x12xf32, #tpu.memory_space<vmem>>, %arg7: memref<48x1xf32, #tpu.memory_space<vmem>>, %arg8: memref<9x1x256xf32, #tpu.memory_space<vmem>>, %arg9: memref<1x48x256xf32, #tpu.memory_space<vmem>>) attributes {dimension_semantics = [#tpu.dimension_semantics<parallel>], iteration_bounds = array<i64: 2>, scalar_prefetch = 0 : i64, scratch_operands = 0 : i64, tpu.core_type = #tpu.core_type<tc>, window_params = [{transform_indices = @transform_0, window_bounds = array<i64: 1, 48, 256>}, {pipeline_mode = #tpu.pipeline_mode<synchronous>, transform_indices = @transform_1, window_bounds = array<i64: 12, 48>}, {pipeline_mode = #tpu.pipeline_mode<synchronous>, transform_indices = @transform_2, window_bounds = array<i64: 12, 1>}, {pipeline_mode = #tpu.pipeline_mode<synchronous>, transform_indices = @transform_3, window_bounds = array<i64: 9, 12, 1>}, {pipeline_mode = #tpu.pipeline_mode<synchronous>, transform_indices = @transform_4, window_bounds = array<i64: 12, 1>}, {pipeline_mode = #tpu.pipeline_mode<synchronous>, transform_indices = @transform_5, window_bounds = array<i64: 48, 12>}, {pipeline_mode = #tpu.pipeline_mode<synchronous>, transform_indices = @transform_6, window_bounds = array<i64: 48, 1>}, {pipeline_mode = #tpu.pipeline_mode<synchronous>, transform_indices = @transform_7, window_bounds = array<i64: 9, 1, 256>}, {transform_indices = @transform_8, window_bounds = array<i64: 1, 48, 256>}]} {
    %c0 = arith.constant 0 : index
    %c0_0 = arith.constant 0 : index
    %c0_1 = arith.constant 0 : index
    %0 = vector.load %arg1[%c0, %c0_0, %c0_1] : memref<1x48x256xf32, #tpu.memory_space<vmem>>, vector<1x48x256xf32>
    %1 = vector.shape_cast %0 : vector<1x48x256xf32> to vector<48x256xf32>
    %c0_2 = arith.constant 0 : index
    %c0_3 = arith.constant 0 : index
    %2 = vector.load %arg2[%c0_2, %c0_3] : memref<12x48xf32, #tpu.memory_space<vmem>>, vector<12x48xf32>
    %cst = arith.constant dense<0.000000e+00> : vector<12x256xf32>
    %3 = tpu.matmul %2, %1, %cst {dimension_numbers = #tpu.dot_dimension_numbers<[1], [0], [0], [1], [0, 0, 1, 1], [], []>} : vector<12x48xf32>, vector<48x256xf32>, vector<12x256xf32> -> vector<12x256xf32>
    %c0_4 = arith.constant 0 : index
    %c0_5 = arith.constant 0 : index
    %4 = vector.load %arg3[%c0_4, %c0_5] : memref<12x1xf32, #tpu.memory_space<vmem>>, vector<12x1xf32>
    %5 = vector.broadcast %4 : vector<12x1xf32> to vector<12x256xf32>
    %6 = arith.addf %3, %5 : vector<12x256xf32>
    %cst_6 = arith.constant 0.000000e+00 : f32
    %7 = vector.broadcast %cst_6 : f32 to vector<12x256xf32>
    %8 = arith.maximumf %6, %7 : vector<12x256xf32>
    %c4 = arith.constant 4 : index
    %c0_7 = arith.constant 0 : index
    %c0_8 = arith.constant 0 : index
    %9 = vector.load %arg4[%c4, %c0_7, %c0_8] : memref<9x12x1xf32, #tpu.memory_space<vmem>>, vector<1x12x1xf32>
    %10 = vector.shape_cast %9 : vector<1x12x1xf32> to vector<12x1xf32>
    %11 = vector.broadcast %10 : vector<12x1xf32> to vector<12x256xf32>
    %12 = arith.mulf %8, %11 : vector<12x256xf32>
    %c0_9 = arith.constant 0 : index
    %c0_10 = arith.constant 0 : index
    %13 = vector.load %arg5[%c0_9, %c0_10] : memref<12x1xf32, #tpu.memory_space<vmem>>, vector<12x1xf32>
    %14 = vector.broadcast %13 : vector<12x1xf32> to vector<12x256xf32>
    %15 = arith.addf %12, %14 : vector<12x256xf32>
    %c17_i32 = arith.constant 17 : i32
    %16 = tpu.dynamic_rotate %8 by %c17_i32 dim 1 : vector<12x256xf32>, i32 -> vector<12x256xf32>
    %c0_11 = arith.constant 0 : index
    %c0_12 = arith.constant 0 : index
    %c0_13 = arith.constant 0 : index
    %17 = vector.load %arg4[%c0_11, %c0_12, %c0_13] : memref<9x12x1xf32, #tpu.memory_space<vmem>>, vector<1x12x1xf32>
    %18 = vector.shape_cast %17 : vector<1x12x1xf32> to vector<12x1xf32>
    %19 = vector.broadcast %18 : vector<12x1xf32> to vector<12x256xf32>
    %20 = arith.mulf %16, %19 : vector<12x256xf32>
    %c0_14 = arith.constant 0 : index
    %c0_15 = arith.constant 0 : index
    %c0_16 = arith.constant 0 : index
    %21 = vector.load %arg8[%c0_14, %c0_15, %c0_16] : memref<9x1x256xf32, #tpu.memory_space<vmem>>, vector<1x1x256xf32>
    %22 = vector.shape_cast %21 : vector<1x1x256xf32> to vector<1x256xf32>
    %23 = vector.broadcast %22 : vector<1x256xf32> to vector<12x256xf32>
    %24 = arith.mulf %20, %23 : vector<12x256xf32>
    %25 = arith.addf %15, %24 : vector<12x256xf32>
    %c16_i32 = arith.constant 16 : i32
    %26 = tpu.dynamic_rotate %8 by %c16_i32 dim 1 : vector<12x256xf32>, i32 -> vector<12x256xf32>
    %c1 = arith.constant 1 : index
    %c0_17 = arith.constant 0 : index
    %c0_18 = arith.constant 0 : index
    %27 = vector.load %arg4[%c1, %c0_17, %c0_18] : memref<9x12x1xf32, #tpu.memory_space<vmem>>, vector<1x12x1xf32>
    %28 = vector.shape_cast %27 : vector<1x12x1xf32> to vector<12x1xf32>
    %29 = vector.broadcast %28 : vector<12x1xf32> to vector<12x256xf32>
    %30 = arith.mulf %26, %29 : vector<12x256xf32>
    %c1_19 = arith.constant 1 : index
    %c0_20 = arith.constant 0 : index
    %c0_21 = arith.constant 0 : index
    %31 = vector.load %arg8[%c1_19, %c0_20, %c0_21] : memref<9x1x256xf32, #tpu.memory_space<vmem>>, vector<1x1x256xf32>
    %32 = vector.shape_cast %31 : vector<1x1x256xf32> to vector<1x256xf32>
    %33 = vector.broadcast %32 : vector<1x256xf32> to vector<12x256xf32>
    %34 = arith.mulf %30, %33 : vector<12x256xf32>
    %35 = arith.addf %25, %34 : vector<12x256xf32>
    %c15_i32 = arith.constant 15 : i32
    %36 = tpu.dynamic_rotate %8 by %c15_i32 dim 1 : vector<12x256xf32>, i32 -> vector<12x256xf32>
    %c2 = arith.constant 2 : index
    %c0_22 = arith.constant 0 : index
    %c0_23 = arith.constant 0 : index
    %37 = vector.load %arg4[%c2, %c0_22, %c0_23] : memref<9x12x1xf32, #tpu.memory_space<vmem>>, vector<1x12x1xf32>
    %38 = vector.shape_cast %37 : vector<1x12x1xf32> to vector<12x1xf32>
    %39 = vector.broadcast %38 : vector<12x1xf32> to vector<12x256xf32>
    %40 = arith.mulf %36, %39 : vector<12x256xf32>
    %c2_24 = arith.constant 2 : index
    %c0_25 = arith.constant 0 : index
    %c0_26 = arith.constant 0 : index
    %41 = vector.load %arg8[%c2_24, %c0_25, %c0_26] : memref<9x1x256xf32, #tpu.memory_space<vmem>>, vector<1x1x256xf32>
    %42 = vector.shape_cast %41 : vector<1x1x256xf32> to vector<1x256xf32>
    %43 = vector.broadcast %42 : vector<1x256xf32> to vector<12x256xf32>
    %44 = arith.mulf %40, %43 : vector<12x256xf32>
    %45 = arith.addf %35, %44 : vector<12x256xf32>
    %c1_i32 = arith.constant 1 : i32
    %46 = tpu.dynamic_rotate %8 by %c1_i32 dim 1 : vector<12x256xf32>, i32 -> vector<12x256xf32>
    %c3 = arith.constant 3 : index
    %c0_27 = arith.constant 0 : index
    %c0_28 = arith.constant 0 : index
    %47 = vector.load %arg4[%c3, %c0_27, %c0_28] : memref<9x12x1xf32, #tpu.memory_space<vmem>>, vector<1x12x1xf32>
    %48 = vector.shape_cast %47 : vector<1x12x1xf32> to vector<12x1xf32>
    %49 = vector.broadcast %48 : vector<12x1xf32> to vector<12x256xf32>
    %50 = arith.mulf %46, %49 : vector<12x256xf32>
    %c3_29 = arith.constant 3 : index
    %c0_30 = arith.constant 0 : index
    %c0_31 = arith.constant 0 : index
    %51 = vector.load %arg8[%c3_29, %c0_30, %c0_31] : memref<9x1x256xf32, #tpu.memory_space<vmem>>, vector<1x1x256xf32>
    %52 = vector.shape_cast %51 : vector<1x1x256xf32> to vector<1x256xf32>
    %53 = vector.broadcast %52 : vector<1x256xf32> to vector<12x256xf32>
    %54 = arith.mulf %50, %53 : vector<12x256xf32>
    %55 = arith.addf %45, %54 : vector<12x256xf32>
    %c255_i32 = arith.constant 255 : i32
    %56 = tpu.dynamic_rotate %8 by %c255_i32 dim 1 : vector<12x256xf32>, i32 -> vector<12x256xf32>
    %c5 = arith.constant 5 : index
    %c0_32 = arith.constant 0 : index
    %c0_33 = arith.constant 0 : index
    %57 = vector.load %arg4[%c5, %c0_32, %c0_33] : memref<9x12x1xf32, #tpu.memory_space<vmem>>, vector<1x12x1xf32>
    %58 = vector.shape_cast %57 : vector<1x12x1xf32> to vector<12x1xf32>
    %59 = vector.broadcast %58 : vector<12x1xf32> to vector<12x256xf32>
    %60 = arith.mulf %56, %59 : vector<12x256xf32>
    %c5_34 = arith.constant 5 : index
    %c0_35 = arith.constant 0 : index
    %c0_36 = arith.constant 0 : index
    %61 = vector.load %arg8[%c5_34, %c0_35, %c0_36] : memref<9x1x256xf32, #tpu.memory_space<vmem>>, vector<1x1x256xf32>
    %62 = vector.shape_cast %61 : vector<1x1x256xf32> to vector<1x256xf32>
    %63 = vector.broadcast %62 : vector<1x256xf32> to vector<12x256xf32>
    %64 = arith.mulf %60, %63 : vector<12x256xf32>
    %65 = arith.addf %55, %64 : vector<12x256xf32>
    %c241_i32 = arith.constant 241 : i32
    %66 = tpu.dynamic_rotate %8 by %c241_i32 dim 1 : vector<12x256xf32>, i32 -> vector<12x256xf32>
    %c6 = arith.constant 6 : index
    %c0_37 = arith.constant 0 : index
    %c0_38 = arith.constant 0 : index
    %67 = vector.load %arg4[%c6, %c0_37, %c0_38] : memref<9x12x1xf32, #tpu.memory_space<vmem>>, vector<1x12x1xf32>
    %68 = vector.shape_cast %67 : vector<1x12x1xf32> to vector<12x1xf32>
    %69 = vector.broadcast %68 : vector<12x1xf32> to vector<12x256xf32>
    %70 = arith.mulf %66, %69 : vector<12x256xf32>
    %c6_39 = arith.constant 6 : index
    %c0_40 = arith.constant 0 : index
    %c0_41 = arith.constant 0 : index
    %71 = vector.load %arg8[%c6_39, %c0_40, %c0_41] : memref<9x1x256xf32, #tpu.memory_space<vmem>>, vector<1x1x256xf32>
    %72 = vector.shape_cast %71 : vector<1x1x256xf32> to vector<1x256xf32>
    %73 = vector.broadcast %72 : vector<1x256xf32> to vector<12x256xf32>
    %74 = arith.mulf %70, %73 : vector<12x256xf32>
    %75 = arith.addf %65, %74 : vector<12x256xf32>
    %c240_i32 = arith.constant 240 : i32
    %76 = tpu.dynamic_rotate %8 by %c240_i32 dim 1 : vector<12x256xf32>, i32 -> vector<12x256xf32>
    %c7 = arith.constant 7 : index
    %c0_42 = arith.constant 0 : index
    %c0_43 = arith.constant 0 : index
    %77 = vector.load %arg4[%c7, %c0_42, %c0_43] : memref<9x12x1xf32, #tpu.memory_space<vmem>>, vector<1x12x1xf32>
    %78 = vector.shape_cast %77 : vector<1x12x1xf32> to vector<12x1xf32>
    %79 = vector.broadcast %78 : vector<12x1xf32> to vector<12x256xf32>
    %80 = arith.mulf %76, %79 : vector<12x256xf32>
    %c7_44 = arith.constant 7 : index
    %c0_45 = arith.constant 0 : index
    %c0_46 = arith.constant 0 : index
    %81 = vector.load %arg8[%c7_44, %c0_45, %c0_46] : memref<9x1x256xf32, #tpu.memory_space<vmem>>, vector<1x1x256xf32>
    %82 = vector.shape_cast %81 : vector<1x1x256xf32> to vector<1x256xf32>
    %83 = vector.broadcast %82 : vector<1x256xf32> to vector<12x256xf32>
    %84 = arith.mulf %80, %83 : vector<12x256xf32>
    %85 = arith.addf %75, %84 : vector<12x256xf32>
    %c239_i32 = arith.constant 239 : i32
    %86 = tpu.dynamic_rotate %8 by %c239_i32 dim 1 : vector<12x256xf32>, i32 -> vector<12x256xf32>
    %c8 = arith.constant 8 : index
    %c0_47 = arith.constant 0 : index
    %c0_48 = arith.constant 0 : index
    %87 = vector.load %arg4[%c8, %c0_47, %c0_48] : memref<9x12x1xf32, #tpu.memory_space<vmem>>, vector<1x12x1xf32>
    %88 = vector.shape_cast %87 : vector<1x12x1xf32> to vector<12x1xf32>
    %89 = vector.broadcast %88 : vector<12x1xf32> to vector<12x256xf32>
    %90 = arith.mulf %86, %89 : vector<12x256xf32>
    %c8_49 = arith.constant 8 : index
    %c0_50 = arith.constant 0 : index
    %c0_51 = arith.constant 0 : index
    %91 = vector.load %arg8[%c8_49, %c0_50, %c0_51] : memref<9x1x256xf32, #tpu.memory_space<vmem>>, vector<1x1x256xf32>
    %92 = vector.shape_cast %91 : vector<1x1x256xf32> to vector<1x256xf32>
    %93 = vector.broadcast %92 : vector<1x256xf32> to vector<12x256xf32>
    %94 = arith.mulf %90, %93 : vector<12x256xf32>
    %95 = arith.addf %85, %94 : vector<12x256xf32>
    %c0_52 = arith.constant 0 : index
    %c0_53 = arith.constant 0 : index
    %96 = vector.load %arg6[%c0_52, %c0_53] : memref<48x12xf32, #tpu.memory_space<vmem>>, vector<48x12xf32>
    %cst_54 = arith.constant dense<0.000000e+00> : vector<48x256xf32>
    %97 = tpu.matmul %96, %95, %cst_54 {dimension_numbers = #tpu.dot_dimension_numbers<[1], [0], [0], [1], [0, 0, 1, 1], [], []>} : vector<48x12xf32>, vector<12x256xf32>, vector<48x256xf32> -> vector<48x256xf32>
    %c0_55 = arith.constant 0 : index
    %c0_56 = arith.constant 0 : index
    %98 = vector.load %arg7[%c0_55, %c0_56] : memref<48x1xf32, #tpu.memory_space<vmem>>, vector<48x1xf32>
    %99 = vector.broadcast %98 : vector<48x1xf32> to vector<48x256xf32>
    %100 = arith.addf %97, %99 : vector<48x256xf32>
    %101 = arith.addf %1, %100 : vector<48x256xf32>
    %cst_57 = arith.constant 0.000000e+00 : f32
    %102 = vector.broadcast %cst_57 : f32 to vector<48x256xf32>
    %103 = arith.maximumf %101, %102 : vector<48x256xf32>
    %c0_58 = arith.constant 0 : index
    %c0_59 = arith.constant 0 : index
    %c0_60 = arith.constant 0 : index
    %104 = vector.load %arg9[%c0_58, %c0_59, %c0_60] : memref<1x48x256xf32, #tpu.memory_space<vmem>>, vector<1x48x256xf32>
    %105 = vector.shape_cast %104 : vector<1x48x256xf32> to vector<48x256xf32>
    %106 = vector.shape_cast %103 : vector<48x256xf32> to vector<1x48x256xf32>
    tpu.vector_store %arg9[%c0_58, %c0_59, %c0_60], %106 {strides = array<i32>} : memref<1x48x256xf32, #tpu.memory_space<vmem>>, vector<1x48x256xf32>,
    return
  }
  func.func @transform_0(%arg0: i32) -> (i32, i32, i32) {
    %c0_i32 = arith.constant 0 : i32
    %c0_i32_0 = arith.constant 0 : i32
    %c0_i32_1 = arith.constant 0 : i32
    return %arg0, %c0_i32, %c0_i32_0 : i32, i32, i32
  }
  func.func @transform_1(%arg0: i32) -> (i32, i32) {
    %c0_i32 = arith.constant 0 : i32
    %c0_i32_0 = arith.constant 0 : i32
    %c0_i32_1 = arith.constant 0 : i32
    return %c0_i32, %c0_i32_0 : i32, i32
  }
  func.func @transform_2(%arg0: i32) -> (i32, i32) {
    %c0_i32 = arith.constant 0 : i32
    %c0_i32_0 = arith.constant 0 : i32
    %c0_i32_1 = arith.constant 0 : i32
    return %c0_i32, %c0_i32_0 : i32, i32
  }
  func.func @transform_3(%arg0: i32) -> (i32, i32, i32) {
    %c0_i32 = arith.constant 0 : i32
    %c0_i32_0 = arith.constant 0 : i32
    %c0_i32_1 = arith.constant 0 : i32
    %c0_i32_2 = arith.constant 0 : i32
    return %c0_i32, %c0_i32_0, %c0_i32_1 : i32, i32, i32
  }
  func.func @transform_4(%arg0: i32) -> (i32, i32) {
    %c0_i32 = arith.constant 0 : i32
    %c0_i32_0 = arith.constant 0 : i32
    %c0_i32_1 = arith.constant 0 : i32
    return %c0_i32, %c0_i32_0 : i32, i32
  }
  func.func @transform_5(%arg0: i32) -> (i32, i32) {
    %c0_i32 = arith.constant 0 : i32
    %c0_i32_0 = arith.constant 0 : i32
    %c0_i32_1 = arith.constant 0 : i32
    return %c0_i32, %c0_i32_0 : i32, i32
  }
  func.func @transform_6(%arg0: i32) -> (i32, i32) {
    %c0_i32 = arith.constant 0 : i32
    %c0_i32_0 = arith.constant 0 : i32
    %c0_i32_1 = arith.constant 0 : i32
    return %c0_i32, %c0_i32_0 : i32, i32
  }
  func.func @transform_7(%arg0: i32) -> (i32, i32, i32) {
    %c0_i32 = arith.constant 0 : i32
    %c0_i32_0 = arith.constant 0 : i32
    %c0_i32_1 = arith.constant 0 : i32
    %c0_i32_2 = arith.constant 0 : i32
    return %c0_i32, %c0_i32_0, %c0_i32_1 : i32, i32, i32
  }
  func.func @transform_8(%arg0: i32) -> (i32, i32, i32) {
    %c0_i32 = arith.constant 0 : i32
    %c0_i32_0 = arith.constant 0 : i32
    %c0_i32_1 = arith.constant 0 : i32
    return %arg0, %c0_i32, %c0_i32_0 : i32, i32, i32
  }
}

</mosaic_0001>

<llo_original>
// kernel: tpu_custom_call.1
$region0: #{tpu_custom_call.1}
  #allocation0 [shape = 'u32[]', space=smem, size = 0x4, offset = 0x4, fixed_abs, tag = 'smem constant byte address 0x4 - core index']
  #allocation1 [shape = 'u32[72,128]{1,0:T(1,128)}', space=vmem, size = 0x9000, scoped, tag = 'internal scratch']
  %s0 = inlined_call_operand.vmem [shape: f32[2,48,256], index: 0, kind: input, shape index: {}]
  %s1 = inlined_call_operand.vmem [shape: f32[12,48], index: 1, kind: input, shape index: {}]
  %s2 = inlined_call_operand.vmem [shape: f32[12,1], index: 2, kind: input, shape index: {}]
  %s3 = inlined_call_operand.vmem [shape: f32[9,12,1], index: 3, kind: input, shape index: {}]
  %s4 = inlined_call_operand.vmem [shape: f32[12,1], index: 4, kind: input, shape index: {}]
  %s5 = inlined_call_operand.vmem [shape: f32[48,12], index: 5, kind: input, shape index: {}]
  %s6 = inlined_call_operand.vmem [shape: f32[48,1], index: 6, kind: input, shape index: {}]
  %s7 = inlined_call_operand.vmem [shape: f32[9,1,256], index: 7, kind: input, shape index: {}]
  %s8 = inlined_call_operand.hbm [shape: f32[2,48,256], index: 8, kind: output, shape index: {}]
  %s9 = sld [smem:[#allocation0]]
  $region65: #{tpu_custom_call.1} parent=0
    _
  %s11 = ssub.s32 1, %s9
  %s12 = scalar_select 0, %s11, %s9
  $region1: #{tpu_custom_call.1} parent=0
    #allocation2 [shape = 'u8[98304]{0}', space=vmem, size = 0x18000, scoped, tag = 'output window, operand 0']
    #allocation3 [shape = 's32[2]{0}', space=sflag, size = 0x8, scoped, tag = 'scoped memory for tpu_custom_call.1']
    %13 = vsyncpa [#allocation3], 0
    %s14 = scalar_lea.sflag [#allocation3], 1
    %15 = vsyncpa %s14, 0
    loop: start=0, step=1, limit=4
    $region2: #{tpu_custom_call.1} parent=1 // loop_pre_header
      _
    $region3: #{tpu_custom_call.1} parent=1 // loop_header
      %s17 = sphi 0, %s21
      %p18 = scmp.ge.s32.totalorder %s17, 4
      %s27 = sphi 0, %s29
      %s30 = sphi 0, %s27
      %s31 = sphi 0, %s30
      %s47 = sphi 0, %s31
      %s51 = sphi 0, %s51
      %s53 = sphi 0, %s51
      %s54 = sphi 0, %s53
      %s68 = sphi 0, %s54
      %s72 = sphi 0, %s72
      %s74 = sphi 0, %s72
      %s75 = sphi 0, %s74
      %s89 = sphi 0, %s75
      %s93 = sphi 0, %s93
      %s95 = sphi 0, %s93
      %s96 = sphi 0, %s95
      %s110 = sphi 0, %s96
      %s114 = sphi 0, %s114
      %s116 = sphi 0, %s114
      %s117 = sphi 0, %s116
      %s131 = sphi 0, %s117
      %s135 = sphi 0, %s135
      %s137 = sphi 0, %s135
      %s138 = sphi 0, %s137
      %s152 = sphi 0, %s138
      %s156 = sphi 0, %s156
      %s158 = sphi 0, %s156
      %s159 = sphi 0, %s158
      %s173 = sphi 0, %s159
      %s177 = sphi 0, %s177
      %s179 = sphi 0, %s177
      %s180 = sphi 0, %s179
      %s194 = sphi 0, %s180
      %s200 = sphi 0, %s202
      %s203 = sphi 0, %s200
      %s204 = sphi 0, %s203
      %s220 = sphi 0, %s204
    $region4: #{tpu_custom_call.1} parent=1 // loop_header_branch
      %20 = sbr.rel (%p18) target = $region8
    $region5: #{tpu_custom_call.1} parent=1 // loop_body
      %s22 = ssub.s32 %s17, 1
      %s23 = ssub.s32 %s17, 2
      %s24 = sadd.s32 %s17, 1
      %s25 = ssub.s32 %s17, %s24
      %p26 = scmp.eq.s32.totalorder %s25, 0
      %s28 = sadd.s32 %s27, 1
      %s29 = scalar_select %p26, %s27, %s28
      %p32 = pneg %p26
      %p33 = scmp.eq.s32.totalorder %s17, 1
      %p34 = por %p32, %p33
      %p35 = scmp.ne.s32.totalorder %s27, %s30
      %p36 = scmp.eq.s32.totalorder %s17, 0
      %p37 = por %p35, %p36
      %p38 = scmp.ne.s32.totalorder %s27, %s30
      %p39 = scmp.eq.s32.totalorder %s22, 1
      %p40 = por %p38, %p39
      %p41 = scmp.ne.s32.totalorder %s30, %s31
      %p42 = scmp.eq.s32.totalorder %s22, 0
      %p43 = por %p41, %p42
      %p44 = scmp.ne.s32.totalorder %s30, %s31
      %p45 = scmp.eq.s32.totalorder %s23, 1
      %p46 = por %p44, %p45
      %p48 = scmp.ne.s32.totalorder %s31, %s47
      %p49 = scmp.eq.s32.totalorder %s23, 0
      %p50 = por %p48, %p49
      %s52 = sadd.s32 %s51, 1
      %p55 = scmp.eq.s32.totalorder %s17, 1
      %p56 = scmp.ne.s32.totalorder %s51, %s53
      %p57 = scmp.eq.s32.totalorder %s17, 0
      %p58 = por %p56, %p57
      %p59 = scmp.ne.s32.totalorder %s51, %s53
      %p60 = scmp.eq.s32.totalorder %s22, 1
      %p61 = por %p59, %p60
      %p62 = scmp.ne.s32.totalorder %s53, %s54
      %p63 = scmp.eq.s32.totalorder %s22, 0
      %p64 = por %p62, %p63
      %p65 = scmp.ne.s32.totalorder %s53, %s54
      %p66 = scmp.eq.s32.totalorder %s23, 1
      %p67 = por %p65, %p66
      %p69 = scmp.ne.s32.totalorder %s54, %s68
      %p70 = scmp.eq.s32.totalorder %s23, 0
      %p71 = por %p69, %p70
      %s73 = sadd.s32 %s72, 1
      %p76 = scmp.eq.s32.totalorder %s17, 1
      %p77 = scmp.ne.s32.totalorder %s72, %s74
      %p78 = scmp.eq.s32.totalorder %s17, 0
      %p79 = por %p77, %p78
      %p80 = scmp.ne.s32.totalorder %s72, %s74
      %p81 = scmp.eq.s32.totalorder %s22, 1
      %p82 = por %p80, %p81
      %p83 = scmp.ne.s32.totalorder %s74, %s75
      %p84 = scmp.eq.s32.totalorder %s22, 0
      %p85 = por %p83, %p84
      %p86 = scmp.ne.s32.totalorder %s74, %s75
      %p87 = scmp.eq.s32.totalorder %s23, 1
      %p88 = por %p86, %p87
      %p90 = scmp.ne.s32.totalorder %s75, %s89
      %p91 = scmp.eq.s32.totalorder %s23, 0
      %p92 = por %p90, %p91
      %s94 = sadd.s32 %s93, 1
      %p97 = scmp.eq.s32.totalorder %s17, 1
      %p98 = scmp.ne.s32.totalorder %s93, %s95
      %p99 = scmp.eq.s32.totalorder %s17, 0
      %p100 = por %p98, %p99
      %p101 = scmp.ne.s32.totalorder %s93, %s95
      %p102 = scmp.eq.s32.totalorder %s22, 1
      %p103 = por %p101, %p102
      %p104 = scmp.ne.s32.totalorder %s95, %s96
      %p105 = scmp.eq.s32.totalorder %s22, 0
      %p106 = por %p104, %p105
      %p107 = scmp.ne.s32.totalorder %s95, %s96
      %p108 = scmp.eq.s32.totalorder %s23, 1
      %p109 = por %p107, %p108
      %p111 = scmp.ne.s32.totalorder %s96, %s110
      %p112 = scmp.eq.s32.totalorder %s23, 0
      %p113 = por %p111, %p112
      %s115 = sadd.s32 %s114, 1
      %p118 = scmp.eq.s32.totalorder %s17, 1
      %p119 = scmp.ne.s32.totalorder %s114, %s116
      %p120 = scmp.eq.s32.totalorder %s17, 0
      %p121 = por %p119, %p120
      %p122 = scmp.ne.s32.totalorder %s114, %s116
      %p123 = scmp.eq.s32.totalorder %s22, 1
      %p124 = por %p122, %p123
      %p125 = scmp.ne.s32.totalorder %s116, %s117
      %p126 = scmp.eq.s32.totalorder %s22, 0
      %p127 = por %p125, %p126
      %p128 = scmp.ne.s32.totalorder %s116, %s117
      %p129 = scmp.eq.s32.totalorder %s23, 1
      %p130 = por %p128, %p129
      %p132 = scmp.ne.s32.totalorder %s117, %s131
      %p133 = scmp.eq.s32.totalorder %s23, 0
      %p134 = por %p132, %p133
      %s136 = sadd.s32 %s135, 1
      %p139 = scmp.eq.s32.totalorder %s17, 1
      %p140 = scmp.ne.s32.totalorder %s135, %s137
      %p141 = scmp.eq.s32.totalorder %s17, 0
      %p142 = por %p140, %p141
      %p143 = scmp.ne.s32.totalorder %s135, %s137
      %p144 = scmp.eq.s32.totalorder %s22, 1
      %p145 = por %p143, %p144
      %p146 = scmp.ne.s32.totalorder %s137, %s138
      %p147 = scmp.eq.s32.totalorder %s22, 0
      %p148 = por %p146, %p147
      %p149 = scmp.ne.s32.totalorder %s137, %s138
      %p150 = scmp.eq.s32.totalorder %s23, 1
      %p151 = por %p149, %p150
      %p153 = scmp.ne.s32.totalorder %s138, %s152
      %p154 = scmp.eq.s32.totalorder %s23, 0
      %p155 = por %p153, %p154
      %s157 = sadd.s32 %s156, 1
      %p160 = scmp.eq.s32.totalorder %s17, 1
      %p161 = scmp.ne.s32.totalorder %s156, %s158
      %p162 = scmp.eq.s32.totalorder %s17, 0
      %p163 = por %p161, %p162
      %p164 = scmp.ne.s32.totalorder %s156, %s158
      %p165 = scmp.eq.s32.totalorder %s22, 1
      %p166 = por %p164, %p165
      %p167 = scmp.ne.s32.totalorder %s158, %s159
      %p168 = scmp.eq.s32.totalorder %s22, 0
      %p169 = por %p167, %p168
      %p170 = scmp.ne.s32.totalorder %s158, %s159
      %p171 = scmp.eq.s32.totalorder %s23, 1
      %p172 = por %p170, %p171
      %p174 = scmp.ne.s32.totalorder %s159, %s173
      %p175 = scmp.eq.s32.totalorder %s23, 0
      %p176 = por %p174, %p175
      %s178 = sadd.s32 %s177, 1
      %p181 = scmp.eq.s32.totalorder %s17, 1
      %p182 = scmp.ne.s32.totalorder %s177, %s179
      %p183 = scmp.eq.s32.totalorder %s17, 0
      %p184 = por %p182, %p183
      %p185 = scmp.ne.s32.totalorder %s177, %s179
      %p186 = scmp.eq.s32.totalorder %s22, 1
      %p187 = por %p185, %p186
      %p188 = scmp.ne.s32.totalorder %s179, %s180
      %p189 = scmp.eq.s32.totalorder %s22, 0
      %p190 = por %p188, %p189
      %p191 = scmp.ne.s32.totalorder %s179, %s180
      %p192 = scmp.eq.s32.totalorder %s23, 1
      %p193 = por %p191, %p192
      %p195 = scmp.ne.s32.totalorder %s180, %s194
      %p196 = scmp.eq.s32.totalorder %s23, 0
      %p197 = por %p195, %p196
      %s198 = ssub.s32 %s17, %s24
      %p199 = scmp.eq.s32.totalorder %s198, 0
      %s201 = sadd.s32 %s200, 1
      %s202 = scalar_select %p199, %s200, %s201
      %p205 = pneg %p199
      %p206 = scmp.eq.s32.totalorder %s17, 1
      %p207 = por %p205, %p206
      %p208 = scmp.ne.s32.totalorder %s200, %s203
      %p209 = scmp.eq.s32.totalorder %s17, 0
      %p210 = por %p208, %p209
      %p211 = scmp.ne.s32.totalorder %s200, %s203
      %p212 = scmp.eq.s32.totalorder %s22, 1
      %p213 = por %p211, %p212
      %p214 = scmp.ne.s32.totalorder %s203, %s204
      %p215 = scmp.eq.s32.totalorder %s22, 0
      %p216 = por %p214, %p215
      %p217 = scmp.ne.s32.totalorder %s203, %s204
      %p218 = scmp.eq.s32.totalorder %s23, 1
      %p219 = por %p217, %p218
      %p221 = scmp.ne.s32.totalorder %s204, %s220
      %p222 = scmp.eq.s32.totalorder %s23, 0
      %p223 = por %p221, %p222
      %p224 = scmp.le.s32.totalorder 1, %s17
      %p225 = scmp.lt.s32.totalorder %s17, 3
      %p226 = pnand %p224, %p225
      %p227 = pneg %p226
      // Predicated region
      $region9: #{tpu_custom_call.1} parent=5 // pred_check
        _
      $region10: #{tpu_custom_call.1} parent=5 // pred_check_branch
        %229 = sbr.rel (%p226) target = $region12
      $region11: #{tpu_custom_call.1} parent=5 // pred_region
        %s230 = ssub.s32 %s17, 1
        // Predicated region
        $region13: #{tpu_custom_call.1} parent=11 // pred_check
          %p231 = pneg %p64
        $region14: #{tpu_custom_call.1} parent=11 // pred_check_branch
          %233 = sbr.rel (%p231) target = $region16
        $region15: #{tpu_custom_call.1} parent=11 // pred_region
          _
        $region16: #{tpu_custom_call.1} parent=11 // pred_fallthru
          _
        // Predicated region
        $region17: #{tpu_custom_call.1} parent=11 // pred_check
          %p234 = pneg %p85
        $region18: #{tpu_custom_call.1} parent=11 // pred_check_branch
          %236 = sbr.rel (%p234) target = $region20
        $region19: #{tpu_custom_call.1} parent=11 // pred_region
          _
        $region20: #{tpu_custom_call.1} parent=11 // pred_fallthru
          _
        // Predicated region
        $region21: #{tpu_custom_call.1} parent=11 // pred_check
          %p237 = pneg %p106
        $region22: #{tpu_custom_call.1} parent=11 // pred_check_branch
          %239 = sbr.rel (%p237) target = $region24
        $region23: #{tpu_custom_call.1} parent=11 // pred_region
          _
        $region24: #{tpu_custom_call.1} parent=11 // pred_fallthru
          _
        // Predicated region
        $region25: #{tpu_custom_call.1} parent=11 // pred_check
          %p240 = pneg %p127
        $region26: #{tpu_custom_call.1} parent=11 // pred_check_branch
          %242 = sbr.rel (%p240) target = $region28
        $region27: #{tpu_custom_call.1} parent=11 // pred_region
          _
        $region28: #{tpu_custom_call.1} parent=11 // pred_fallthru
          _
        // Predicated region
        $region29: #{tpu_custom_call.1} parent=11 // pred_check
          %p243 = pneg %p148
        $region30: #{tpu_custom_call.1} parent=11 // pred_check_branch
          %245 = sbr.rel (%p243) target = $region32
        $region31: #{tpu_custom_call.1} parent=11 // pred_region
          _
        $region32: #{tpu_custom_call.1} parent=11 // pred_fallthru
          _
        // Predicated region
        $region33: #{tpu_custom_call.1} parent=11 // pred_check
          %p246 = pneg %p169
        $region34: #{tpu_custom_call.1} parent=11 // pred_check_branch
          %248 = sbr.rel (%p246) target = $region36
        $region35: #{tpu_custom_call.1} parent=11 // pred_region
          _
        $region36: #{tpu_custom_call.1} parent=11 // pred_fallthru
          _
        // Predicated region
        $region37: #{tpu_custom_call.1} parent=11 // pred_check
          %p249 = pneg %p190
        $region38: #{tpu_custom_call.1} parent=11 // pred_check_branch
          %251 = sbr.rel (%p249) target = $region40
        $region39: #{tpu_custom_call.1} parent=11 // pred_region
          _
        $region40: #{tpu_custom_call.1} parent=11 // pred_fallthru
          _
      $region12: #{tpu_custom_call.1} parent=5 // pred_fallthru
        _
      %p252 = scmp.lt.s32.totalorder %s17, 2
      // Predicated region
      $region41: #{tpu_custom_call.1} parent=5 // pred_check
        %p253 = pneg %p252
      $region42: #{tpu_custom_call.1} parent=5 // pred_check_branch
        %255 = sbr.rel (%p253) target = $region44
      $region43: #{tpu_custom_call.1} parent=5 // pred_region
        // Predicated region
        $region45: #{tpu_custom_call.1} parent=43 // pred_check
          %p256 = pneg %p37
        $region46: #{tpu_custom_call.1} parent=43 // pred_check_branch
          %258 = sbr.rel (%p256) target = $region48
        $region47: #{tpu_custom_call.1} parent=43 // pred_region
          %p259 = scmp.lt.s32.totalorder %s17, 1
          %s260 = scalar_select %p259, %s17, 1
          %s261 = smul.addr %s260, 12
          %s262 = smul.addr %s261, 8
          %s263 = scalar_lea.vmem %s0, %s262
        $region48: #{tpu_custom_call.1} parent=43 // pred_fallthru
          _
      $region44: #{tpu_custom_call.1} parent=5 // pred_fallthru
        _
      %p264 = scmp.le.s32.totalorder 1, %s17
      %p265 = scmp.lt.s32.totalorder %s17, 3
      %p266 = pnand %p264, %p265
      %p267 = pneg %p266
      // Predicated region
      $region49: #{tpu_custom_call.1} parent=5 // pred_check
        _
      $region50: #{tpu_custom_call.1} parent=5 // pred_check_branch
        %269 = sbr.rel (%p266) target = $region52
      $region51: #{tpu_custom_call.1} parent=5 // pred_region
        %s270 = ssub.s32 %s17, 1
        %p271 = scmp.lt.s32.totalorder %s22, 1
        %s272 = scalar_select %p271, %s22, 1
        %s273 = smul.addr %s272, 12
        %s274 = smul.addr %s273, 8
        %s275 = scalar_lea.vmem %s0, %s274
        %p276 = pneg %p43
        %p277 = pneg %p40
        %p278 = pneg %p64
        %p279 = pneg %p61
        %p280 = pneg %p85
        %p281 = pneg %p82
        %p282 = pneg %p106
        %p283 = pneg %p103
        %p284 = pneg %p127
        %p285 = pneg %p124
        %p286 = pneg %p148
        %p287 = pneg %p145
        %p288 = pneg %p169
        %p289 = pneg %p166
        %p290 = pneg %p190
        %p291 = pneg %p187
        %p292 = pneg %p216
        %p293 = pneg %p213
        %s294 = sand.u32 %s203, 1
        %s295 = scalar_lea.sflag [#allocation3], %s294
        %s296 = sand.u32 %s203, 1
        %s297 = smul.addr %s296, 96
        %s298 = scalar_lea.vmem [#allocation2], %s297
        %p299 = scmp.lt.s32.totalorder %s22, 1
        %s300 = scalar_select %p299, %s22, 1
        %s301 = smul.addr %s300, 12
        %s302 = smul.addr %s301, 8
        %s303 = scalar_lea.vmem %s0, %s302
        %v304 = vld [vmem:[%s303] sm:$0xff]
        %v305 = vld [vmem:[%s303 + $0x8] sm:$0xff]
        %v306 = vld [vmem:[%s303 + $0x10] sm:$0xff]
        %v307 = vld [vmem:[%s303 + $0x18] sm:$0xff]
        %v308 = vld [vmem:[%s303 + $0x20] sm:$0xff]
        %v309 = vld [vmem:[%s303 + $0x28] sm:$0xff]
        %v310 = vld [vmem:[%s303 + $0x30] sm:$0xff]
        %v311 = vld [vmem:[%s303 + $0x38] sm:$0xff]
        %v312 = vld [vmem:[%s303 + $0x40] sm:$0xff]
        %v313 = vld [vmem:[%s303 + $0x48] sm:$0xff]
        %v314 = vld [vmem:[%s303 + $0x50] sm:$0xff]
        %v315 = vld [vmem:[%s303 + $0x58] sm:$0xff]
        %v316 = vld [vmem:[%s1] sm:$0xff]
        %v317 = vld [vmem:[%s1 + $0x8] sm:$0xf]
        %v318 = vld [vmem:[%s2] sm:$0xff]
        %v319 = vld [vmem:[%s2 + $0x8] sm:$0xf]
        %321 = vset.pattern.permute.xlu0 0
        %322 = vperm.xlu0 %321, %v318
        %v323 = vpop.permute.xlu0 %322
        %326 = vset.pattern.permute.xlu0 0
        %327 = vperm.xlu0 %326, %v319
        %v328 = vpop.permute.xlu0 %327
        %vm330 = vcmask 392192
        %v332 = vsel %vm330, %v316, 0
        %v335 = vsel %vm330, %v317, 0
        %337 = vmatpush.msra.mxu0 0.0
        %338 = vmatpush.msra.mxu0 0.0
        %339 = vmatpush.msra.mxu0 0.0
        %340 = vmatpush.msra.mxu0 0.0
        %341 = vmatpush.msra.mxu0 0.0
        %342 = vmatpush.msra.mxu0 0.0
        %343 = vmatpush.msra.mxu0 0.0
        %344 = vmatpush.msra.mxu0 0.0
        %345 = vmatpush.msra.mxu0 0.0
        %346 = vmatpush.msra.mxu0 0.0
        %347 = vmatpush.msra.mxu0 %v314
        %348 = vmatpush.msra.mxu0 %v312
        %349 = vmatpush.msra.mxu0 %v310
        %350 = vmatpush.msra.mxu0 %v308
        %351 = vmatpush.msra.mxu0 %v306
        %352 = vmatpush.msra.mxu0 %v304
        %353 = vmatmul.f32.gmra.mxu0 %v332
        %v354 = vpop.f32.mrf.mxu0
        %v355 = vadd.f32 %v323, %v354
        %356 = vmatmul.f32.gmra.mxu0 %v335
        %v357 = vpop.f32.mrf.mxu0
        %v358 = vadd.f32 %v328, %v357
        %359 = vdwg.mxu0
        %360 = vmatpush.msra.mxu0 0.0
        %361 = vmatpush.msra.mxu0 0.0
        %362 = vmatpush.msra.mxu0 0.0
        %363 = vmatpush.msra.mxu0 0.0
        %364 = vmatpush.msra.mxu0 0.0
        %365 = vmatpush.msra.mxu0 0.0
        %366 = vmatpush.msra.mxu0 0.0
        %367 = vmatpush.msra.mxu0 0.0
        %368 = vmatpush.msra.mxu0 0.0
        %369 = vmatpush.msra.mxu0 0.0
        %370 = vmatpush.msra.mxu0 %v315
        %371 = vmatpush.msra.mxu0 %v313
        %372 = vmatpush.msra.mxu0 %v311
        %373 = vmatpush.msra.mxu0 %v309
        %374 = vmatpush.msra.mxu0 %v307
        %375 = vmatpush.msra.mxu0 %v305
        %376 = vmatmul.f32.gmra.mxu0 %v332
        %v377 = vpop.f32.mrf.mxu0
        %v378 = vadd.f32 %v323, %v377
        %379 = vmatmul.f32.gmra.mxu0 %v335
        %v380 = vpop.f32.mrf.mxu0
        %v381 = vadd.f32 %v328, %v380
        %382 = vdwg.mxu0
        %v383 = vmax.f32 %v355, 0.0
        %v384 = vmax.f32 %v378, 0.0
        %v385 = vmax.f32 %v358, 0.0
        %v386 = vmax.f32 %v381, 0.0
        %s387 = scalar_lea.vmem %s3, 64
        %v388 = vld [vmem:[%s387] sm:$0xff]
        %v389 = vld [vmem:[%s387 + $0x8] sm:$0xf]
        %391 = vset.pattern.permute.xlu0 0
        %392 = vperm.xlu0 %391, %v388
        %v393 = vpop.permute.xlu0 %392
        %396 = vset.pattern.permute.xlu0 0
        %397 = vperm.xlu0 %396, %v389
        %v398 = vpop.permute.xlu0 %397
        %v400 = vmul.f32 %v383, %v393
        %v401 = vmul.f32 %v384, %v393
        %v402 = vmul.f32 %v385, %v398
        %v403 = vmul.f32 %v386, %v398
        %v404 = vld [vmem:[%s4] sm:$0xff]
        %v405 = vld [vmem:[%s4 + $0x8] sm:$0xf]
        %407 = vset.pattern.permute.xlu0 0
        %408 = vperm.xlu0 %407, %v404
        %v409 = vpop.permute.xlu0 %408
        %412 = vset.pattern.permute.xlu0 0
        %413 = vperm.xlu0 %412, %v405
        %v414 = vpop.permute.xlu0 %413
        %v416 = vadd.f32 %v400, %v409
        %v417 = vadd.f32 %v401, %v409
        %v418 = vadd.f32 %v402, %v414
        %v419 = vadd.f32 %v403, %v414
        %420 = vrot.lane.b32.xlu0 %v383, 17
        %v421 = vpop.permute.xlu0 %420
        %422 = vrot.lane.b32.xlu0 %v385, 17
        %v423 = vpop.permute.xlu0 %422
        %424 = vrot.lane.b32.xlu0 %v384, 17
        %v425 = vpop.permute.xlu0 %424
        %426 = vrot.lane.b32.xlu0 %v386, 17
        %v427 = vpop.permute.xlu0 %426
        %v428 = vlaneseq
        %v429 = vand.u32 %v428, 127
        %vm430 = vcmp.lt.s32.totalorder %v429, 17
        %v431 = vsel %vm430, %v421, %v425
        %v432 = vsel %vm430, %v423, %v427
        %v433 = vsel %vm430, %v425, %v421
        %v434 = vsel %vm430, %v427, %v423
        %v435 = vld [vmem:[%s3] sm:$0xff]
        %v436 = vld [vmem:[%s3 + $0x8] sm:$0xf]
        %438 = vset.pattern.permute.xlu0 0
        %439 = vperm.xlu0 %438, %v435
        %v440 = vpop.permute.xlu0 %439
        %443 = vset.pattern.permute.xlu0 0
        %444 = vperm.xlu0 %443, %v436
        %v445 = vpop.permute.xlu0 %444
        %v447 = vmul.f32 %v433, %v440
        %v448 = vmul.f32 %v431, %v440
        %v449 = vmul.f32 %v434, %v445
        %v450 = vmul.f32 %v432, %v445
        %v451 = vld [vmem:[%s7] sm:$0x3]
        %v453 = vperm.slane %v451, 0
        %v454 = vperm.slane %v451, 1
        %v457 = vmul.f32 %v447, %v453
        %v458 = vmul.f32 %v448, %v454
        %v459 = vmul.f32 %v449, %v453
        %v460 = vmul.f32 %v450, %v454
        %v461 = vadd.f32 %v416, %v457
        %v462 = vadd.f32 %v417, %v458
        %v463 = vadd.f32 %v418, %v459
        %v464 = vadd.f32 %v419, %v460
        %465 = vrot.lane.b32.xlu0 %v383, 16
        %v466 = vpop.permute.xlu0 %465
        %467 = vrot.lane.b32.xlu0 %v385, 16
        %v468 = vpop.permute.xlu0 %467
        %469 = vrot.lane.b32.xlu0 %v384, 16
        %v470 = vpop.permute.xlu0 %469
        %471 = vrot.lane.b32.xlu0 %v386, 16
        %v472 = vpop.permute.xlu0 %471
        %vm473 = vcmp.lt.s32.totalorder %v429, 16
        %v474 = vsel %vm473, %v466, %v470
        %v475 = vsel %vm473, %v468, %v472
        %v476 = vsel %vm473, %v470, %v466
        %v477 = vsel %vm473, %v472, %v468
        %s478 = scalar_lea.vmem %s3, 16
        %v479 = vld [vmem:[%s478] sm:$0xff]
        %v480 = vld [vmem:[%s478 + $0x8] sm:$0xf]
        %482 = vset.pattern.permute.xlu0 0
        %483 = vperm.xlu0 %482, %v479
        %v484 = vpop.permute.xlu0 %483
        %487 = vset.pattern.permute.xlu0 0
        %488 = vperm.xlu0 %487, %v480
        %v489 = vpop.permute.xlu0 %488
        %v491 = vmul.f32 %v476, %v484
        %v492 = vmul.f32 %v474, %v484
        %v493 = vmul.f32 %v477, %v489
        %v494 = vmul.f32 %v475, %v489
        %s495 = scalar_lea.vmem %s7, 2
        %v496 = vld [vmem:[%s495] sm:$0x3]
        %v498 = vperm.slane %v496, 0
        %v499 = vperm.slane %v496, 1
        %v502 = vmul.f32 %v491, %v498
        %v503 = vmul.f32 %v492, %v499
        %v504 = vmul.f32 %v493, %v498
        %v505 = vmul.f32 %v494, %v499
        %v506 = vadd.f32 %v461, %v502
        %v507 = vadd.f32 %v462, %v503
        %v508 = vadd.f32 %v463, %v504
        %v509 = vadd.f32 %v464, %v505
        %510 = vrot.lane.b32.xlu0 %v383, 15
        %v511 = vpop.permute.xlu0 %510
        %512 = vrot.lane.b32.xlu0 %v385, 15
        %v513 = vpop.permute.xlu0 %512
        %514 = vrot.lane.b32.xlu0 %v384, 15
        %v515 = vpop.permute.xlu0 %514
        %516 = vrot.lane.b32.xlu0 %v386, 15
        %v517 = vpop.permute.xlu0 %516
        %vm518 = vcmp.lt.s32.totalorder %v429, 15
        %v519 = vsel %vm518, %v511, %v515
        %v520 = vsel %vm518, %v513, %v517
        %v521 = vsel %vm518, %v515, %v511
        %v522 = vsel %vm518, %v517, %v513
        %s523 = scalar_lea.vmem %s3, 32
        %v524 = vld [vmem:[%s523] sm:$0xff]
        %v525 = vld [vmem:[%s523 + $0x8] sm:$0xf]
        %527 = vset.pattern.permute.xlu0 0
        %528 = vperm.xlu0 %527, %v524
        %v529 = vpop.permute.xlu0 %528
        %532 = vset.pattern.permute.xlu0 0
        %533 = vperm.xlu0 %532, %v525
        %v534 = vpop.permute.xlu0 %533
        %v536 = vmul.f32 %v521, %v529
        %v537 = vmul.f32 %v519, %v529
        %v538 = vmul.f32 %v522, %v534
        %v539 = vmul.f32 %v520, %v534
        %s540 = scalar_lea.vmem %s7, 4
        %v541 = vld [vmem:[%s540] sm:$0x3]
        %v543 = vperm.slane %v541, 0
        %v544 = vperm.slane %v541, 1
        %v547 = vmul.f32 %v536, %v543
        %v548 = vmul.f32 %v537, %v544
        %v549 = vmul.f32 %v538, %v543
        %v550 = vmul.f32 %v539, %v544
        %v551 = vadd.f32 %v506, %v547
        %v552 = vadd.f32 %v507, %v548
        %v553 = vadd.f32 %v508, %v549
        %v554 = vadd.f32 %v509, %v550
        %555 = vrot.lane.b32.xlu0 %v383, 1
        %v556 = vpop.permute.xlu0 %555
        %557 = vrot.lane.b32.xlu0 %v385, 1
        %v558 = vpop.permute.xlu0 %557
        %559 = vrot.lane.b32.xlu0 %v384, 1
        %v560 = vpop.permute.xlu0 %559
        %561 = vrot.lane.b32.xlu0 %v386, 1
        %v562 = vpop.permute.xlu0 %561
        %vm563 = vcmp.lt.s32.totalorder %v429, 1
        %v564 = vsel %vm563, %v556, %v560
        %v565 = vsel %vm563, %v558, %v562
        %v566 = vsel %vm563, %v560, %v556
        %v567 = vsel %vm563, %v562, %v558
        %s568 = scalar_lea.vmem %s3, 48
        %v569 = vld [vmem:[%s568] sm:$0xff]
        %v570 = vld [vmem:[%s568 + $0x8] sm:$0xf]
        %572 = vset.pattern.permute.xlu0 0
        %573 = vperm.xlu0 %572, %v569
        %v574 = vpop.permute.xlu0 %573
        %577 = vset.pattern.permute.xlu0 0
        %578 = vperm.xlu0 %577, %v570
        %v579 = vpop.permute.xlu0 %578
        %v581 = vmul.f32 %v566, %v574
        %v582 = vmul.f32 %v564, %v574
        %v583 = vmul.f32 %v567, %v579
        %v584 = vmul.f32 %v565, %v579
        %s585 = scalar_lea.vmem %s7, 6
        %v586 = vld [vmem:[%s585] sm:$0x3]
        %v588 = vperm.slane %v586, 0
        %v589 = vperm.slane %v586, 1
        %v592 = vmul.f32 %v581, %v588
        %v593 = vmul.f32 %v582, %v589
        %v594 = vmul.f32 %v583, %v588
        %v595 = vmul.f32 %v584, %v589
        %v596 = vadd.f32 %v551, %v592
        %v597 = vadd.f32 %v552, %v593
        %v598 = vadd.f32 %v553, %v594
        %v599 = vadd.f32 %v554, %v595
        %600 = vrot.lane.b32.xlu0 %v383, 127
        %v601 = vpop.permute.xlu0 %600
        %602 = vrot.lane.b32.xlu0 %v385, 127
        %v603 = vpop.permute.xlu0 %602
        %604 = vrot.lane.b32.xlu0 %v384, 127
        %v605 = vpop.permute.xlu0 %604
        %606 = vrot.lane.b32.xlu0 %v386, 127
        %v607 = vpop.permute.xlu0 %606
        %vm608 = vcmp.lt.s32.totalorder %v429, 127
        %v609 = vsel %vm608, %v601, %v605
        %v610 = vsel %vm608, %v603, %v607
        %v611 = vsel %vm608, %v605, %v601
        %v612 = vsel %vm608, %v607, %v603
        %s613 = scalar_lea.vmem %s3, 80
        %v614 = vld [vmem:[%s613] sm:$0xff]
        %v615 = vld [vmem:[%s613 + $0x8] sm:$0xf]
        %617 = vset.pattern.permute.xlu0 0
        %618 = vperm.xlu0 %617, %v614
        %v619 = vpop.permute.xlu0 %618
        %622 = vset.pattern.permute.xlu0 0
        %623 = vperm.xlu0 %622, %v615
        %v624 = vpop.permute.xlu0 %623
        %v626 = vmul.f32 %v609, %v619
        %v627 = vmul.f32 %v611, %v619
        %v628 = vmul.f32 %v610, %v624
        %v629 = vmul.f32 %v612, %v624
        %s630 = scalar_lea.vmem %s7, 10
        %v631 = vld [vmem:[%s630] sm:$0x3]
        %v633 = vperm.slane %v631, 0
        %v634 = vperm.slane %v631, 1
        %v637 = vmul.f32 %v626, %v633
        %v638 = vmul.f32 %v627, %v634
        %v639 = vmul.f32 %v628, %v633
        %v640 = vmul.f32 %v629, %v634
        %v641 = vadd.f32 %v596, %v637
        %v642 = vadd.f32 %v597, %v638
        %v643 = vadd.f32 %v598, %v639
        %v644 = vadd.f32 %v599, %v640
        %645 = vrot.lane.b32.xlu0 %v383, 113
        %v646 = vpop.permute.xlu0 %645
        %647 = vrot.lane.b32.xlu0 %v385, 113
        %v648 = vpop.permute.xlu0 %647
        %649 = vrot.lane.b32.xlu0 %v384, 113
        %v650 = vpop.permute.xlu0 %649
        %651 = vrot.lane.b32.xlu0 %v386, 113
        %v652 = vpop.permute.xlu0 %651
        %vm653 = vcmp.lt.s32.totalorder %v429, 113
        %v654 = vsel %vm653, %v646, %v650
        %v655 = vsel %vm653, %v648, %v652
        %v656 = vsel %vm653, %v650, %v646
        %v657 = vsel %vm653, %v652, %v648
        %s658 = scalar_lea.vmem %s3, 96
        %v659 = vld [vmem:[%s658] sm:$0xff]
        %v660 = vld [vmem:[%s658 + $0x8] sm:$0xf]
        %662 = vset.pattern.permute.xlu0 0
        %663 = vperm.xlu0 %662, %v659
        %v664 = vpop.permute.xlu0 %663
        %667 = vset.pattern.permute.xlu0 0
        %668 = vperm.xlu0 %667, %v660
        %v669 = vpop.permute.xlu0 %668
        %v671 = vmul.f32 %v654, %v664
        %v672 = vmul.f32 %v656, %v664
        %v673 = vmul.f32 %v655, %v669
        %v674 = vmul.f32 %v657, %v669
        %s675 = scalar_lea.vmem %s7, 12
        %v676 = vld [vmem:[%s675] sm:$0x3]
        %v678 = vperm.slane %v676, 0
        %v679 = vperm.slane %v676, 1
        %v682 = vmul.f32 %v671, %v678
        %v683 = vmul.f32 %v672, %v679
        %v684 = vmul.f32 %v673, %v678
        %v685 = vmul.f32 %v674, %v679
        %v686 = vadd.f32 %v641, %v682
        %v687 = vadd.f32 %v642, %v683
        %v688 = vadd.f32 %v643, %v684
        %v689 = vadd.f32 %v644, %v685
        %690 = vrot.lane.b32.xlu0 %v383, 112
        %v691 = vpop.permute.xlu0 %690
        %692 = vrot.lane.b32.xlu0 %v385, 112
        %v693 = vpop.permute.xlu0 %692
        %694 = vrot.lane.b32.xlu0 %v384, 112
        %v695 = vpop.permute.xlu0 %694
        %696 = vrot.lane.b32.xlu0 %v386, 112
        %v697 = vpop.permute.xlu0 %696
        %vm698 = vcmp.lt.s32.totalorder %v429, 112
        %v699 = vsel %vm698, %v691, %v695
        %v700 = vsel %vm698, %v693, %v697
        %v701 = vsel %vm698, %v695, %v691
        %v702 = vsel %vm698, %v697, %v693
        %s703 = scalar_lea.vmem %s3, 112
        %v704 = vld [vmem:[%s703] sm:$0xff]
        %v705 = vld [vmem:[%s703 + $0x8] sm:$0xf]
        %707 = vset.pattern.permute.xlu0 0
        %708 = vperm.xlu0 %707, %v704
        %v709 = vpop.permute.xlu0 %708
        %712 = vset.pattern.permute.xlu0 0
        %713 = vperm.xlu0 %712, %v705
        %v714 = vpop.permute.xlu0 %713
        %v716 = vmul.f32 %v699, %v709
        %v717 = vmul.f32 %v701, %v709
        %v718 = vmul.f32 %v700, %v714
        %v719 = vmul.f32 %v702, %v714
        %s720 = scalar_lea.vmem %s7, 14
        %v721 = vld [vmem:[%s720] sm:$0x3]
        %v723 = vperm.slane %v721, 0
        %v724 = vperm.slane %v721, 1
        %v727 = vmul.f32 %v716, %v723
        %v728 = vmul.f32 %v717, %v724
        %v729 = vmul.f32 %v718, %v723
        %v730 = vmul.f32 %v719, %v724
        %v731 = vadd.f32 %v686, %v727
        %v732 = vadd.f32 %v687, %v728
        %v733 = vadd.f32 %v688, %v729
        %v734 = vadd.f32 %v689, %v730
        %735 = vrot.lane.b32.xlu0 %v383, 111
        %v736 = vpop.permute.xlu0 %735
        %737 = vrot.lane.b32.xlu0 %v385, 111
        %v738 = vpop.permute.xlu0 %737
        %739 = vrot.lane.b32.xlu0 %v384, 111
        %v740 = vpop.permute.xlu0 %739
        %741 = vrot.lane.b32.xlu0 %v386, 111
        %v742 = vpop.permute.xlu0 %741
        %vm743 = vcmp.lt.s32.totalorder %v429, 111
        %v744 = vsel %vm743, %v736, %v740
        %v745 = vsel %vm743, %v738, %v742
        %v746 = vsel %vm743, %v740, %v736
        %v747 = vsel %vm743, %v742, %v738
        %s748 = scalar_lea.vmem %s3, 128
        %v749 = vld [vmem:[%s748] sm:$0xff]
        %v750 = vld [vmem:[%s748 + $0x8] sm:$0xf]
        %752 = vset.pattern.permute.xlu0 0
        %753 = vperm.xlu0 %752, %v749
        %v754 = vpop.permute.xlu0 %753
        %757 = vset.pattern.permute.xlu0 0
        %758 = vperm.xlu0 %757, %v750
        %v759 = vpop.permute.xlu0 %758
        %v761 = vmul.f32 %v744, %v754
        %v762 = vmul.f32 %v746, %v754
        %v763 = vmul.f32 %v745, %v759
        %v764 = vmul.f32 %v747, %v759
        %s765 = scalar_lea.vmem %s7, 16
        %v766 = vld [vmem:[%s765] sm:$0x3]
        %v768 = vperm.slane %v766, 0
        %v769 = vperm.slane %v766, 1
        %v772 = vmul.f32 %v761, %v768
        %v773 = vmul.f32 %v762, %v769
        %v774 = vmul.f32 %v763, %v768
        %v775 = vmul.f32 %v764, %v769
        %v776 = vadd.f32 %v731, %v772
        %v777 = vadd.f32 %v732, %v773
        %v778 = vadd.f32 %v733, %v774
        %v779 = vadd.f32 %v734, %v775
        %v780 = vld [vmem:[%s5] sm:$0xff]
        %v781 = vld [vmem:[%s5 + $0x8] sm:$0xff]
        %v782 = vld [vmem:[%s5 + $0x10] sm:$0xff]
        %v783 = vld [vmem:[%s5 + $0x18] sm:$0xff]
        %v784 = vld [vmem:[%s5 + $0x20] sm:$0xff]
        %v785 = vld [vmem:[%s5 + $0x28] sm:$0xff]
        %v786 = vld [vmem:[%s6] sm:$0xff]
        %v787 = vld [vmem:[%s6 + $0x8] sm:$0xff]
        %v788 = vld [vmem:[%s6 + $0x10] sm:$0xff]
        %v789 = vld [vmem:[%s6 + $0x18] sm:$0xff]
        %v790 = vld [vmem:[%s6 + $0x20] sm:$0xff]
        %v791 = vld [vmem:[%s6 + $0x28] sm:$0xff]
        %793 = vset.pattern.permute.xlu0 0
        %794 = vperm.xlu0 %793, %v786
        %v795 = vpop.permute.xlu0 %794
        %798 = vset.pattern.permute.xlu0 0
        %799 = vperm.xlu0 %798, %v787
        %v800 = vpop.permute.xlu0 %799
        %803 = vset.pattern.permute.xlu0 0
        %804 = vperm.xlu0 %803, %v788
        %v805 = vpop.permute.xlu0 %804
        %808 = vset.pattern.permute.xlu0 0
        %809 = vperm.xlu0 %808, %v789
        %v810 = vpop.permute.xlu0 %809
        %813 = vset.pattern.permute.xlu0 0
        %814 = vperm.xlu0 %813, %v790
        %v815 = vpop.permute.xlu0 %814
        %818 = vset.pattern.permute.xlu0 0
        %819 = vperm.xlu0 %818, %v791
        %v820 = vpop.permute.xlu0 %819
        %vm822 = vcmask 97280
        %v824 = vsel %vm822, %v780, 0
        %v827 = vsel %vm822, %v781, 0
        %v830 = vsel %vm822, %v782, 0
        %v833 = vsel %vm822, %v783, 0
        %v836 = vsel %vm822, %v784, 0
        %v839 = vsel %vm822, %v785, 0
        %vm841 = vcmask 1043456
        %v843 = vsel %vm841, %v778, 0
        %v846 = vsel %vm841, %v779, 0
        %848 = vmatpush.msra.mxu0 0.0
        %849 = vmatpush.msra.mxu0 0.0
        %850 = vmatpush.msra.mxu0 0.0
        %851 = vmatpush.msra.mxu0 0.0
        %852 = vmatpush.msra.mxu0 0.0
        %853 = vmatpush.msra.mxu0 0.0
        %854 = vmatpush.msra.mxu0 0.0
        %855 = vmatpush.msra.mxu0 0.0
        %856 = vmatpush.msra.mxu0 0.0
        %857 = vmatpush.msra.mxu0 0.0
        %858 = vmatpush.msra.mxu0 0.0
        %859 = vmatpush.msra.mxu0 0.0
        %860 = vmatpush.msra.mxu0 0.0
        %861 = vmatpush.msra.mxu0 0.0
        %862 = vmatpush.msra.mxu0 %v843
        %863 = vmatpush.msra.mxu0 %v776
        %864 = vmatmul.f32.gmra.mxu0 %v824
        %v865 = vpop.f32.mrf.mxu0
        %v866 = vadd.f32 %v795, %v865
        %867 = vmatmul.f32.gmra.mxu0 %v827
        %v868 = vpop.f32.mrf.mxu0
        %v869 = vadd.f32 %v800, %v868
        %870 = vmatmul.f32.gmra.mxu0 %v830
        %v871 = vpop.f32.mrf.mxu0
        %v872 = vadd.f32 %v805, %v871
        %873 = vmatmul.f32.gmra.mxu0 %v833
        %v874 = vpop.f32.mrf.mxu0
        %v875 = vadd.f32 %v810, %v874
        %876 = vmatmul.f32.gmra.mxu0 %v836
        %v877 = vpop.f32.mrf.mxu0
        %v878 = vadd.f32 %v815, %v877
        %879 = vmatmul.f32.gmra.mxu0 %v839
        %v880 = vpop.f32.mrf.mxu0
        %v881 = vadd.f32 %v820, %v880
        %882 = vdwg.mxu0
        %883 = vmatpush.msra.mxu0 0.0
        %884 = vmatpush.msra.mxu0 0.0
        %885 = vmatpush.msra.mxu0 0.0
        %886 = vmatpush.msra.mxu0 0.0
        %887 = vmatpush.msra.mxu0 0.0
        %888 = vmatpush.msra.mxu0 0.0
        %889 = vmatpush.msra.mxu0 0.0
        %890 = vmatpush.msra.mxu0 0.0
        %891 = vmatpush.msra.mxu0 0.0
        %892 = vmatpush.msra.mxu0 0.0
        %893 = vmatpush.msra.mxu0 0.0
        %894 = vmatpush.msra.mxu0 0.0
        %895 = vmatpush.msra.mxu0 0.0
        %896 = vmatpush.msra.mxu0 0.0
        %897 = vmatpush.msra.mxu0 %v846
        %898 = vmatpush.msra.mxu0 %v777
        %899 = vmatmul.f32.gmra.mxu0 %v824
        %v900 = vpop.f32.mrf.mxu0
        %v901 = vadd.f32 %v795, %v900
        %902 = vmatmul.f32.gmra.mxu0 %v827
        %v903 = vpop.f32.mrf.mxu0
        %v904 = vadd.f32 %v800, %v903
        %905 = vmatmul.f32.gmra.mxu0 %v830
        %v906 = vpop.f32.mrf.mxu0
        %v907 = vadd.f32 %v805, %v906
        %908 = vmatmul.f32.gmra.mxu0 %v833
        %v909 = vpop.f32.mrf.mxu0
        %v910 = vadd.f32 %v810, %v909
        %911 = vmatmul.f32.gmra.mxu0 %v836
        %v912 = vpop.f32.mrf.mxu0
        %v913 = vadd.f32 %v815, %v912
        %914 = vmatmul.f32.gmra.mxu0 %v839
        %v915 = vpop.f32.mrf.mxu0
        %v916 = vadd.f32 %v820, %v915
        %917 = vdwg.mxu0
        %v918 = vadd.f32 %v304, %v866
        %v919 = vadd.f32 %v305, %v901
        %v920 = vadd.f32 %v306, %v869
        %v921 = vadd.f32 %v307, %v904
        %v922 = vadd.f32 %v308, %v872
        %v923 = vadd.f32 %v309, %v907
        %v924 = vadd.f32 %v310, %v875
        %v925 = vadd.f32 %v311, %v910
        %v926 = vadd.f32 %v312, %v878
        %v927 = vadd.f32 %v313, %v913
        %v928 = vadd.f32 %v314, %v881
        %v929 = vadd.f32 %v315, %v916
        %v930 = vmax.f32 %v918, 0.0
        %v931 = vmax.f32 %v919, 0.0
        %v932 = vmax.f32 %v920, 0.0
        %v933 = vmax.f32 %v921, 0.0
        %v934 = vmax.f32 %v922, 0.0
        %v935 = vmax.f32 %v923, 0.0
        %v936 = vmax.f32 %v924, 0.0
        %v937 = vmax.f32 %v925, 0.0
        %v938 = vmax.f32 %v926, 0.0
        %v939 = vmax.f32 %v927, 0.0
        %v940 = vmax.f32 %v928, 0.0
        %v941 = vmax.f32 %v929, 0.0
        %942 = vst [vmem:[%s298] sm:$0xff] %v930
        %943 = vst [vmem:[%s298 + $0x8] sm:$0xff] %v931
        %944 = vst [vmem:[%s298 + $0x10] sm:$0xff] %v932
        %945 = vst [vmem:[%s298 + $0x18] sm:$0xff] %v933
        %946 = vst [vmem:[%s298 + $0x20] sm:$0xff] %v934
        %947 = vst [vmem:[%s298 + $0x28] sm:$0xff] %v935
        %948 = vst [vmem:[%s298 + $0x30] sm:$0xff] %v936
        %949 = vst [vmem:[%s298 + $0x38] sm:$0xff] %v937
        %950 = vst [vmem:[%s298 + $0x40] sm:$0xff] %v938
        %951 = vst [vmem:[%s298 + $0x48] sm:$0xff] %v939
        %952 = vst [vmem:[%s298 + $0x50] sm:$0xff] %v940
        %953 = vst [vmem:[%s298 + $0x58] sm:$0xff] %v941
        %s954 = sand.u32 %s203, 1
        %s955 = scalar_lea.sflag [#allocation3], %s954
        %s956 = sand.u32 %s203, 1
        %s957 = smul.addr %s956, 96
        %s958 = scalar_lea.vmem [#allocation2], %s957
        // Predicated region
        $region53: #{tpu_custom_call.1} parent=51 // pred_check
          %p959 = pneg %p213
        $region54: #{tpu_custom_call.1} parent=51 // pred_check_branch
          %961 = sbr.rel (%p959) target = $region56
        $region55: #{tpu_custom_call.1} parent=51 // pred_region
          %963 = vsyncadd %s955, 0
          %s964 = smul.addr %s22, 12
          %s965 = smul.addr %s964, 8
          %s966 = scalar_lea.hbm %s8, %s965
          %s967 = sshll.u32 %s958, 4
          %s968 = int_to_ptr.vmem [resolvable:$true] %s967
          %s969 = sshll.u32 %s966, 4
          %s970 = int_to_ptr.hbm [resolvable:$true] %s969
          %975 = dma.vmem_to_hbm [thread:$0]  %s968, 1536, %s970, %s955, 256, 256, 16
        $region56: #{tpu_custom_call.1} parent=51 // pred_fallthru
          _
      $region52: #{tpu_custom_call.1} parent=5 // pred_fallthru
        _
      %p976 = scmp.le.s32.totalorder 2, %s17
      // Predicated region
      $region57: #{tpu_custom_call.1} parent=5 // pred_check
        %p977 = pneg %p976
      $region58: #{tpu_custom_call.1} parent=5 // pred_check_branch
        %979 = sbr.rel (%p977) target = $region60
      $region59: #{tpu_custom_call.1} parent=5 // pred_region
        %s980 = ssub.s32 %s17, 2
        // Predicated region
        $region61: #{tpu_custom_call.1} parent=59 // pred_check
          %p981 = pneg %p219
        $region62: #{tpu_custom_call.1} parent=59 // pred_check_branch
          %983 = sbr.rel (%p981) target = $region64
        $region63: #{tpu_custom_call.1} parent=59 // pred_region
          %s984 = sand.u32 %s204, 1
          %s985 = scalar_lea.sflag [#allocation3], %s984
          %s986 = sand.u32 %s204, 1
          %s987 = smul.addr %s986, 96
          %s988 = scalar_lea.vmem [#allocation2], %s987
          %990 = dma.done %s985, 1536
        $region64: #{tpu_custom_call.1} parent=59 // pred_fallthru
          _
      $region60: #{tpu_custom_call.1} parent=5 // pred_fallthru
        _
    $region6: #{tpu_custom_call.1} parent=1 // loop_footer
      %s21 = sadd.s32 1, %s17
    $region7: #{tpu_custom_call.1} parent=1 // loop_footer_branch
      %16 = sbr.rel target = $region3
    $region8: #{tpu_custom_call.1} parent=1 // loop_exit
      _
    %991 = vsyncpa [#allocation3], 1
    %s992 = scalar_lea.sflag [#allocation3], 1
    %993 = vsyncpa %s992, 1

</llo_original>
